<compile_context>
chip_gen: v7x
topology: tpu7x:2x2x1
jax: 0.10.0
libtpu: 0.0.40
codegen_flags: <defaults>
</compile_context>

<pallas_src>
import functools

import jax
import jax.numpy as jnp
from jax.experimental import pallas as pl
from jax.experimental.pallas import tpu as pltpu


def _round_up(v, m):
    return (v + m - 1) // m * m


def _head_kernel(x_ref, y_ref, mw_ref, wsq_ref, wo_ref, b_ref, out_ref, *, hp):
    """One batch tile of the classification head.

    x_ref  : (TB, Hp)  bf16   CLS features
    y_ref  : (TB, Fp)  f32    manual features
    mw_ref : (Fp, Hp)  f32    manual_dense weight (f32 for precision)
    wsq_ref: (8*Hp, Hp) bf16  [w1x; w1y; w2; ...; w7] stacked on rows
    wo_ref : (Hp, 128) bf16   out_proj weight (col 0 real, rest zero)
    b_ref  : (16, Hp)  f32    row0=mb, rows1..7=b1..b7, row8=bo
    out_ref: (TB, 128) f32    sigmoid probabilities (col 0 real)
    """
    f32 = jnp.float32
    bf16 = jnp.bfloat16

    # y = tanh(manual_dense(manual_features))  -- kept in f32 for precision.
    y = jnp.tanh(
        jnp.dot(y_ref[...], mw_ref[...], preferred_element_type=f32)
        + b_ref[0:1, :])

    # x = relu(dense1(concat([x, y], -1)))  -- concat realized as split matmul.
    h = (jnp.dot(x_ref[...], wsq_ref[0:hp, :], preferred_element_type=f32)
         + jnp.dot(y.astype(bf16), wsq_ref[hp:2 * hp, :],
                   preferred_element_type=f32)
         + b_ref[1:2, :])
    h = jnp.maximum(h.astype(bf16), 0)      # ReLU in bf16; keep h bf16 between layers

    # dense2..dense7 with ReLU (dropout = identity in eval mode).
    for layer in range(2, 8):
        w = wsq_ref[layer * hp:(layer + 1) * hp, :]
        h = jnp.dot(h, w, preferred_element_type=f32) + b_ref[layer:layer + 1, :]
        h = jnp.maximum(h.astype(bf16), 0)

    # out_proj_new + sigmoid (padded columns have zero weight/bias -> 0.5,
    # sliced off in the wrapper).
    logits = (jnp.dot(h, wo_ref[...], preferred_element_type=f32)
              + b_ref[8:9, :128])
    out_ref[...] = jax.nn.sigmoid(logits)


def classification_head(features, manual_features, padded_params):
    """features: [B, S, H] f32 (encoder output), manual_features: [B, F].

    padded_params: output of `pad_params`.  Returns sigmoid probs [B, 1] f32.
    """
    B, _, H = features.shape
    F = manual_features.shape[-1]
    Hp = padded_params["wo"].shape[0]
    Fp = padded_params["mw"].shape[0]

    # Batch tile: multiple of 16 (bf16 sublane packing), capped at 256 to fill
    # the 256x256 MXU on v6e/v7x.
    TB = min(256, _round_up(B, 16))
    Bp = _round_up(B, TB)
    num_tiles = Bp // TB

    # Slice the CLS token in the wrapper -> no [B, S, H] DMA into the kernel.
    # Zero padding keeps padded hidden columns / batch rows exactly zero
    # through the whole chain.
    x = features[:, 0, :]
    x = jnp.pad(x, ((0, Bp - B), (0, Hp - H))).astype(jnp.bfloat16)
    y = jnp.pad(manual_features.astype(jnp.float32),
                ((0, Bp - B), (0, Fp - F)))

    mw = padded_params["mw"]
    wsq = padded_params["wsq"]
    wo = padded_params["wo"]
    bias = padded_params["bias"]

    def row_spec(shape):                       # per-step tiles (double-buffered)
        return pl.BlockSpec(shape, lambda i: (i, 0))

    def const_spec(shape):                     # resident weights: single buffer
        return pl.BlockSpec(shape, lambda i: (0, 0),
                            pipeline_mode=pl.Buffered(1))

    consts = (mw, wsq, wo, bias)
    weight_bytes = sum(int(a.size) * a.dtype.itemsize for a in consts)
    # Double-buffered streaming tiles: x (bf16), y (f32), out (f32).
    stream_bytes = 2 * TB * (Hp * 2 + Fp * 4 + 128 * 4)
    vmem_limit = int(weight_bytes + 2 * stream_bytes) + (16 << 20)

    flops = 2 * Bp * (Fp * Hp + 8 * Hp * Hp + Hp * 128)
    bytes_accessed = (weight_bytes
                      + int(x.size) * 2 + int(y.size) * 4   # bf16 x, f32 y
                      + Bp * 128 * 4)                        # f32 output
    cost = pl.CostEstimate(flops=int(flops),
                           transcendentals=int(Bp * (Hp + 128)),
                           bytes_accessed=int(bytes_accessed))

    # Megacore sharding only pays when there are enough grid steps to amortize
    # the duplicated weight DMA on each TensorCore.
    dim_sem = ("parallel",) if num_tiles > 2 else ("arbitrary",)

    out = pl.pallas_call(
        functools.partial(_head_kernel, hp=Hp),
        grid=(num_tiles,),
        out_shape=jax.ShapeDtypeStruct((Bp, 128), jnp.float32),
        in_specs=[row_spec((TB, Hp)),
                  row_spec((TB, Fp)),
                  const_spec(mw.shape),
                  const_spec(wsq.shape),
                  const_spec(wo.shape),
                  const_spec(bias.shape)],
        out_specs=pl.BlockSpec((TB, 128), lambda i: (i, 0)),
        compiler_params=pltpu.CompilerParams(
            dimension_semantics=dim_sem,
            vmem_limit_bytes=vmem_limit),
        cost_estimate=cost,
    )(x, y, mw, wsq, wo, bias)

    return out[:B, :1]


def init_params(key, feature_size, hidden_size):
    """Deterministic synthetic init (f32, unpadded).  Weights stored as
    [in, out] (transposed w.r.t. PyTorch nn.Linear)."""
    H, F = hidden_size, feature_size
    keys = jax.random.split(key, 20)
    s = 0.05

    def w(k, shape):
        return jax.random.normal(k, shape, jnp.float32) * s

    p = {}
    p["mw"] = w(keys[0], (F, H))
    p["mb"] = w(keys[1], (1, H))
    # dense1 takes concat([x, y]) of width 2H -> split into two [H, H] blocks.
    w1 = w(keys[2], (2 * H, H))
    p["w1x"], p["w1y"] = w1[:H, :], w1[H:, :]
    p["b1"] = w(keys[3], (1, H))
    for i, kw, kb in ((2, 4, 5), (3, 6, 7), (4, 8, 9), (5, 10, 11),
                      (6, 12, 13), (7, 14, 15)):
        p[f"w{i}"] = w(keys[kw], (H, H))
        p[f"b{i}"] = w(keys[kb], (1, H))
    p["wo"] = w(keys[16], (H, 1))
    p["bo"] = w(keys[17], (1, 1))
    return p


def pad_params(p, feature_size, hidden_size):
    """One-time padding / packing to 128-lane multiples.

    - square weights (w1x, w1y, w2..w7) are stacked into one (8*Hp, Hp) bf16 slab
    - the 9 biases are packed into one (16, Hp) f32 array
    - manual_dense weight stays f32 (precision of raw tabular features)
    Zero padding keeps padded hidden columns exactly zero through the chain.
    """
    H, F = hidden_size, feature_size
    Hp = _round_up(H, 128)
    Fp = _round_up(F, 128)

    def pad2(a, r, c):
        return jnp.pad(a, ((0, r - a.shape[0]), (0, c - a.shape[1])))

    sq = [p["w1x"], p["w1y"]] + [p[f"w{i}"] for i in range(2, 8)]
    wsq = jnp.concatenate([pad2(a, Hp, Hp) for a in sq],
                          axis=0).astype(jnp.bfloat16)

    bias = jnp.zeros((16, Hp), jnp.float32)
    bias = bias.at[0, :H].set(p["mb"][0])
    for i in range(1, 8):
        bias = bias.at[i, :H].set(p[f"b{i}"][0])
    bias = bias.at[8, :1].set(p["bo"][0])

    return {
        "mw": pad2(p["mw"], Fp, Hp).astype(jnp.float32),
        "wsq": wsq,
        "wo": pad2(p["wo"], Hp, 128).astype(jnp.bfloat16),
        "bias": bias,
    }


def reference_head(features, manual_features, p):
    """Pure-JAX f32 reference (matches the PyTorch module in eval mode)."""
    x = features[:, 0, :]
    y = jnp.tanh(manual_features.astype(jnp.float32) @ p["mw"] + p["mb"])
    h = jax.nn.relu(x @ p["w1x"] + y @ p["w1y"] + p["b1"])
    for i in range(2, 8):
        h = jax.nn.relu(h @ p[f"w{i}"] + p[f"b{i}"])
    return jax.nn.sigmoid(h @ p["wo"] + p["bo"])


if __name__ == "__main__":
    B, S, H, F = 2, 8, 32, 16

    key = jax.random.PRNGKey(0)
    k_feat, k_man, k_par = jax.random.split(key, 3)

    features = jax.random.normal(k_feat, (B, S, H), jnp.float32)  # encoder output stand-in
    manual_features = jax.random.normal(k_man, (B, F), jnp.float32)
    params = init_params(k_par, feature_size=F, hidden_size=H)
    padded = pad_params(params, feature_size=F, hidden_size=H)

    prob = classification_head(features, manual_features, padded)
    prob = jax.block_until_ready(prob)

    ref = reference_head(features, manual_features, params)
    assert prob.shape == (B, 1)
    # bf16 MXU path vs f32 reference -> relaxed tolerance.
    assert jnp.allclose(prob, ref, atol=2e-2, rtol=2e-2), (prob, ref)

    print("KERNEL_OK")
</pallas_src>

<mosaic_0001>
module attributes {stable_mosaic.version = 11 : i64} {
  func.func @_head_kernel(%arg0: i32, %arg1: memref<16x128xbf16, #tpu.memory_space<vmem>>, %arg2: memref<16x128xf32, #tpu.memory_space<vmem>>, %arg3: memref<128x128xf32, #tpu.memory_space<vmem>>, %arg4: memref<1024x128xbf16, #tpu.memory_space<vmem>>, %arg5: memref<128x128xbf16, #tpu.memory_space<vmem>>, %arg6: memref<16x128xf32, #tpu.memory_space<vmem>>, %arg7: memref<16x128xf32, #tpu.memory_space<vmem>>) attributes {dimension_semantics = [#tpu.dimension_semantics<arbitrary>], iteration_bounds = array<i64: 1>, scalar_prefetch = 0 : i64, scratch_operands = 0 : i64, tpu.core_type = #tpu.core_type<tc>, window_params = [{transform_indices = @transform_0, window_bounds = array<i64: 16, 128>}, {transform_indices = @transform_1, window_bounds = array<i64: 16, 128>}, {pipeline_mode = #tpu.pipeline_mode<synchronous>, transform_indices = @transform_2, window_bounds = array<i64: 128, 128>}, {pipeline_mode = #tpu.pipeline_mode<synchronous>, transform_indices = @transform_3, window_bounds = array<i64: 1024, 128>}, {pipeline_mode = #tpu.pipeline_mode<synchronous>, transform_indices = @transform_4, window_bounds = array<i64: 128, 128>}, {pipeline_mode = #tpu.pipeline_mode<synchronous>, transform_indices = @transform_5, window_bounds = array<i64: 16, 128>}, {transform_indices = @transform_6, window_bounds = array<i64: 16, 128>}]} {
    %c0 = arith.constant 0 : index
    %c0_0 = arith.constant 0 : index
    %0 = vector.load %arg2[%c0, %c0_0] : memref<16x128xf32, #tpu.memory_space<vmem>>, vector<16x128xf32>
    %c0_1 = arith.constant 0 : index
    %c0_2 = arith.constant 0 : index
    %1 = vector.load %arg3[%c0_1, %c0_2] : memref<128x128xf32, #tpu.memory_space<vmem>>, vector<128x128xf32>
    %cst = arith.constant dense<0.000000e+00> : vector<16x128xf32>
    %2 = tpu.matmul %0, %1, %cst {dimension_numbers = #tpu.dot_dimension_numbers<[1], [0], [0], [1], [0, 0, 1, 1], [], []>} : vector<16x128xf32>, vector<128x128xf32>, vector<16x128xf32> -> vector<16x128xf32>
    %c0_3 = arith.constant 0 : index
    %c0_4 = arith.constant 0 : index
    %3 = vector.load %arg6[%c0_3, %c0_4] : memref<16x128xf32, #tpu.memory_space<vmem>>, vector<1x128xf32>
    %4 = vector.broadcast %3 : vector<1x128xf32> to vector<16x128xf32>
    %5 = arith.addf %2, %4 : vector<16x128xf32>
    %6 = math.tanh %5 : vector<16x128xf32>
    %c0_5 = arith.constant 0 : index
    %c0_6 = arith.constant 0 : index
    %7 = vector.load %arg1[%c0_5, %c0_6] : memref<16x128xbf16, #tpu.memory_space<vmem>>, vector<16x128xbf16>
    %c0_7 = arith.constant 0 : index
    %c0_8 = arith.constant 0 : index
    %8 = vector.load %arg4[%c0_7, %c0_8] : memref<1024x128xbf16, #tpu.memory_space<vmem>>, vector<128x128xbf16>
    %cst_9 = arith.constant dense<0.000000e+00> : vector<16x128xf32>
    %9 = tpu.matmul %7, %8, %cst_9 {dimension_numbers = #tpu.dot_dimension_numbers<[1], [0], [0], [1], [0, 0, 1, 1], [], []>} : vector<16x128xbf16>, vector<128x128xbf16>, vector<16x128xf32> -> vector<16x128xf32>
    %10 = arith.truncf %6 : vector<16x128xf32> to vector<16x128xbf16>
    %c128 = arith.constant 128 : index
    %c0_10 = arith.constant 0 : index
    %11 = vector.load %arg4[%c128, %c0_10] : memref<1024x128xbf16, #tpu.memory_space<vmem>>, vector<128x128xbf16>
    %cst_11 = arith.constant dense<0.000000e+00> : vector<16x128xf32>
    %12 = tpu.matmul %10, %11, %cst_11 {dimension_numbers = #tpu.dot_dimension_numbers<[1], [0], [0], [1], [0, 0, 1, 1], [], []>} : vector<16x128xbf16>, vector<128x128xbf16>, vector<16x128xf32> -> vector<16x128xf32>
    %13 = arith.addf %9, %12 : vector<16x128xf32>
    %c1 = arith.constant 1 : index
    %c0_12 = arith.constant 0 : index
    %14 = vector.load %arg6[%c1, %c0_12] : memref<16x128xf32, #tpu.memory_space<vmem>>, vector<1x128xf32>
    %15 = vector.broadcast %14 : vector<1x128xf32> to vector<16x128xf32>
    %16 = arith.addf %13, %15 : vector<16x128xf32>
    %17 = arith.truncf %16 : vector<16x128xf32> to vector<16x128xbf16>
    %cst_13 = arith.constant 0.000000e+00 : bf16
    %18 = vector.broadcast %cst_13 : bf16 to vector<16x128xbf16>
    %19 = arith.maximumf %17, %18 : vector<16x128xbf16>
    %c256 = arith.constant 256 : index
    %c0_14 = arith.constant 0 : index
    %20 = vector.load %arg4[%c256, %c0_14] : memref<1024x128xbf16, #tpu.memory_space<vmem>>, vector<128x128xbf16>
    %cst_15 = arith.constant dense<0.000000e+00> : vector<16x128xf32>
    %21 = tpu.matmul %19, %20, %cst_15 {dimension_numbers = #tpu.dot_dimension_numbers<[1], [0], [0], [1], [0, 0, 1, 1], [], []>} : vector<16x128xbf16>, vector<128x128xbf16>, vector<16x128xf32> -> vector<16x128xf32>
    %c2 = arith.constant 2 : index
    %c0_16 = arith.constant 0 : index
    %22 = vector.load %arg6[%c2, %c0_16] : memref<16x128xf32, #tpu.memory_space<vmem>>, vector<1x128xf32>
    %23 = vector.broadcast %22 : vector<1x128xf32> to vector<16x128xf32>
    %24 = arith.addf %21, %23 : vector<16x128xf32>
    %25 = arith.truncf %24 : vector<16x128xf32> to vector<16x128xbf16>
    %cst_17 = arith.constant 0.000000e+00 : bf16
    %26 = vector.broadcast %cst_17 : bf16 to vector<16x128xbf16>
    %27 = arith.maximumf %25, %26 : vector<16x128xbf16>
    %c384 = arith.constant 384 : index
    %c0_18 = arith.constant 0 : index
    %28 = vector.load %arg4[%c384, %c0_18] : memref<1024x128xbf16, #tpu.memory_space<vmem>>, vector<128x128xbf16>
    %cst_19 = arith.constant dense<0.000000e+00> : vector<16x128xf32>
    %29 = tpu.matmul %27, %28, %cst_19 {dimension_numbers = #tpu.dot_dimension_numbers<[1], [0], [0], [1], [0, 0, 1, 1], [], []>} : vector<16x128xbf16>, vector<128x128xbf16>, vector<16x128xf32> -> vector<16x128xf32>
    %c3 = arith.constant 3 : index
    %c0_20 = arith.constant 0 : index
    %30 = vector.load %arg6[%c3, %c0_20] : memref<16x128xf32, #tpu.memory_space<vmem>>, vector<1x128xf32>
    %31 = vector.broadcast %30 : vector<1x128xf32> to vector<16x128xf32>
    %32 = arith.addf %29, %31 : vector<16x128xf32>
    %33 = arith.truncf %32 : vector<16x128xf32> to vector<16x128xbf16>
    %cst_21 = arith.constant 0.000000e+00 : bf16
    %34 = vector.broadcast %cst_21 : bf16 to vector<16x128xbf16>
    %35 = arith.maximumf %33, %34 : vector<16x128xbf16>
    %c512 = arith.constant 512 : index
    %c0_22 = arith.constant 0 : index
    %36 = vector.load %arg4[%c512, %c0_22] : memref<1024x128xbf16, #tpu.memory_space<vmem>>, vector<128x128xbf16>
    %cst_23 = arith.constant dense<0.000000e+00> : vector<16x128xf32>
    %37 = tpu.matmul %35, %36, %cst_23 {dimension_numbers = #tpu.dot_dimension_numbers<[1], [0], [0], [1], [0, 0, 1, 1], [], []>} : vector<16x128xbf16>, vector<128x128xbf16>, vector<16x128xf32> -> vector<16x128xf32>
    %c4 = arith.constant 4 : index
    %c0_24 = arith.constant 0 : index
    %38 = vector.load %arg6[%c4, %c0_24] : memref<16x128xf32, #tpu.memory_space<vmem>>, vector<1x128xf32>
    %39 = vector.broadcast %38 : vector<1x128xf32> to vector<16x128xf32>
    %40 = arith.addf %37, %39 : vector<16x128xf32>
    %41 = arith.truncf %40 : vector<16x128xf32> to vector<16x128xbf16>
    %cst_25 = arith.constant 0.000000e+00 : bf16
    %42 = vector.broadcast %cst_25 : bf16 to vector<16x128xbf16>
    %43 = arith.maximumf %41, %42 : vector<16x128xbf16>
    %c640 = arith.constant 640 : index
    %c0_26 = arith.constant 0 : index
    %44 = vector.load %arg4[%c640, %c0_26] : memref<1024x128xbf16, #tpu.memory_space<vmem>>, vector<128x128xbf16>
    %cst_27 = arith.constant dense<0.000000e+00> : vector<16x128xf32>
    %45 = tpu.matmul %43, %44, %cst_27 {dimension_numbers = #tpu.dot_dimension_numbers<[1], [0], [0], [1], [0, 0, 1, 1], [], []>} : vector<16x128xbf16>, vector<128x128xbf16>, vector<16x128xf32> -> vector<16x128xf32>
    %c5 = arith.constant 5 : index
    %c0_28 = arith.constant 0 : index
    %46 = vector.load %arg6[%c5, %c0_28] : memref<16x128xf32, #tpu.memory_space<vmem>>, vector<1x128xf32>
    %47 = vector.broadcast %46 : vector<1x128xf32> to vector<16x128xf32>
    %48 = arith.addf %45, %47 : vector<16x128xf32>
    %49 = arith.truncf %48 : vector<16x128xf32> to vector<16x128xbf16>
    %cst_29 = arith.constant 0.000000e+00 : bf16
    %50 = vector.broadcast %cst_29 : bf16 to vector<16x128xbf16>
    %51 = arith.maximumf %49, %50 : vector<16x128xbf16>
    %c768 = arith.constant 768 : index
    %c0_30 = arith.constant 0 : index
    %52 = vector.load %arg4[%c768, %c0_30] : memref<1024x128xbf16, #tpu.memory_space<vmem>>, vector<128x128xbf16>
    %cst_31 = arith.constant dense<0.000000e+00> : vector<16x128xf32>
    %53 = tpu.matmul %51, %52, %cst_31 {dimension_numbers = #tpu.dot_dimension_numbers<[1], [0], [0], [1], [0, 0, 1, 1], [], []>} : vector<16x128xbf16>, vector<128x128xbf16>, vector<16x128xf32> -> vector<16x128xf32>
    %c6 = arith.constant 6 : index
    %c0_32 = arith.constant 0 : index
    %54 = vector.load %arg6[%c6, %c0_32] : memref<16x128xf32, #tpu.memory_space<vmem>>, vector<1x128xf32>
    %55 = vector.broadcast %54 : vector<1x128xf32> to vector<16x128xf32>
    %56 = arith.addf %53, %55 : vector<16x128xf32>
    %57 = arith.truncf %56 : vector<16x128xf32> to vector<16x128xbf16>
    %cst_33 = arith.constant 0.000000e+00 : bf16
    %58 = vector.broadcast %cst_33 : bf16 to vector<16x128xbf16>
    %59 = arith.maximumf %57, %58 : vector<16x128xbf16>
    %c896 = arith.constant 896 : index
    %c0_34 = arith.constant 0 : index
    %60 = vector.load %arg4[%c896, %c0_34] : memref<1024x128xbf16, #tpu.memory_space<vmem>>, vector<128x128xbf16>
    %cst_35 = arith.constant dense<0.000000e+00> : vector<16x128xf32>
    %61 = tpu.matmul %59, %60, %cst_35 {dimension_numbers = #tpu.dot_dimension_numbers<[1], [0], [0], [1], [0, 0, 1, 1], [], []>} : vector<16x128xbf16>, vector<128x128xbf16>, vector<16x128xf32> -> vector<16x128xf32>
    %c7 = arith.constant 7 : index
    %c0_36 = arith.constant 0 : index
    %62 = vector.load %arg6[%c7, %c0_36] : memref<16x128xf32, #tpu.memory_space<vmem>>, vector<1x128xf32>
    %63 = vector.broadcast %62 : vector<1x128xf32> to vector<16x128xf32>
    %64 = arith.addf %61, %63 : vector<16x128xf32>
    %65 = arith.truncf %64 : vector<16x128xf32> to vector<16x128xbf16>
    %cst_37 = arith.constant 0.000000e+00 : bf16
    %66 = vector.broadcast %cst_37 : bf16 to vector<16x128xbf16>
    %67 = arith.maximumf %65, %66 : vector<16x128xbf16>
    %c0_38 = arith.constant 0 : index
    %c0_39 = arith.constant 0 : index
    %68 = vector.load %arg5[%c0_38, %c0_39] : memref<128x128xbf16, #tpu.memory_space<vmem>>, vector<128x128xbf16>
    %cst_40 = arith.constant dense<0.000000e+00> : vector<16x128xf32>
    %69 = tpu.matmul %67, %68, %cst_40 {dimension_numbers = #tpu.dot_dimension_numbers<[1], [0], [0], [1], [0, 0, 1, 1], [], []>} : vector<16x128xbf16>, vector<128x128xbf16>, vector<16x128xf32> -> vector<16x128xf32>
    %c8 = arith.constant 8 : index
    %c0_41 = arith.constant 0 : index
    %70 = vector.load %arg6[%c8, %c0_41] : memref<16x128xf32, #tpu.memory_space<vmem>>, vector<1x128xf32>
    %71 = vector.broadcast %70 : vector<1x128xf32> to vector<16x128xf32>
    %72 = arith.addf %69, %71 : vector<16x128xf32>
    %73 = arith.negf %72 : vector<16x128xf32>
    %74 = math.exp %73 : vector<16x128xf32>
    %cst_42 = arith.constant 1.000000e+00 : f32
    %75 = vector.broadcast %cst_42 : f32 to vector<16x128xf32>
    %76 = arith.addf %75, %74 : vector<16x128xf32>
    %77 = arith.divf %75, %76 : vector<16x128xf32>
    %c0_43 = arith.constant 0 : index
    %c0_44 = arith.constant 0 : index
    %78 = vector.load %arg7[%c0_43, %c0_44] : memref<16x128xf32, #tpu.memory_space<vmem>>, vector<16x128xf32>
    tpu.vector_store %arg7[%c0_43, %c0_44], %77 {strides = array<i32>} : memref<16x128xf32, #tpu.memory_space<vmem>>, vector<16x128xf32>,
    return
  }
  func.func @transform_0(%arg0: i32) -> (i32, i32) {
    %c0_i32 = arith.constant 0 : i32
    %c0_i32_0 = arith.constant 0 : i32
    return %arg0, %c0_i32 : i32, i32
  }
  func.func @transform_1(%arg0: i32) -> (i32, i32) {
    %c0_i32 = arith.constant 0 : i32
    %c0_i32_0 = arith.constant 0 : i32
    return %arg0, %c0_i32 : i32, i32
  }
  func.func @transform_2(%arg0: i32) -> (i32, i32) {
    %c0_i32 = arith.constant 0 : i32
    %c0_i32_0 = arith.constant 0 : i32
    %c0_i32_1 = arith.constant 0 : i32
    return %c0_i32, %c0_i32_0 : i32, i32
  }
  func.func @transform_3(%arg0: i32) -> (i32, i32) {
    %c0_i32 = arith.constant 0 : i32
    %c0_i32_0 = arith.constant 0 : i32
    %c0_i32_1 = arith.constant 0 : i32
    return %c0_i32, %c0_i32_0 : i32, i32
  }
  func.func @transform_4(%arg0: i32) -> (i32, i32) {
    %c0_i32 = arith.constant 0 : i32
    %c0_i32_0 = arith.constant 0 : i32
    %c0_i32_1 = arith.constant 0 : i32
    return %c0_i32, %c0_i32_0 : i32, i32
  }
  func.func @transform_5(%arg0: i32) -> (i32, i32) {
    %c0_i32 = arith.constant 0 : i32
    %c0_i32_0 = arith.constant 0 : i32
    %c0_i32_1 = arith.constant 0 : i32
    return %c0_i32, %c0_i32_0 : i32, i32
  }
  func.func @transform_6(%arg0: i32) -> (i32, i32) {
    %c0_i32 = arith.constant 0 : i32
    %c0_i32_0 = arith.constant 0 : i32
    return %arg0, %c0_i32 : i32, i32
  }
}

</mosaic_0001>

<llo_original>
// kernel: tpu_custom_call.1
$region0: #{tpu_custom_call.1}
  #allocation0 [shape = 'u32[]', space=smem, size = 0x4, offset = 0x4, fixed_abs, tag = 'smem constant byte address 0x4 - core index']
  #allocation1 [shape = 'u32[144,128]{1,0:T(1,128)}', space=vmem, size = 0x12000, scoped, tag = 'internal scratch']
  %s0 = inlined_call_operand.hbm [shape: bf16[16,128], index: 0, kind: input, shape index: {}]
  %s1 = inlined_call_operand.hbm [shape: f32[16,128], index: 1, kind: input, shape index: {}]
  %s2 = inlined_call_operand.hbm [shape: f32[128,128], index: 2, kind: input, shape index: {}]
  %s3 = inlined_call_operand.hbm [shape: bf16[1024,128], index: 3, kind: input, shape index: {}]
  %s4 = inlined_call_operand.hbm [shape: bf16[128,128], index: 4, kind: input, shape index: {}]
  %s5 = inlined_call_operand.vmem [shape: f32[16,128], index: 5, kind: input, shape index: {}]
  %s6 = inlined_call_operand.hbm [shape: f32[16,128], index: 6, kind: output, shape index: {}]
  %s7 = sld [smem:[#allocation0]]
  $region54: #{tpu_custom_call.1} parent=0
    _
  %s9 = ssub.s32 1, %s7
  %s10 = scalar_select 0, %s9, %s7
  $region1: #{tpu_custom_call.1} parent=0
    #allocation2 [shape = 'u8[4096]{0}', space=vmem, size = 0x1000, scoped, tag = 'input window, operand 0, single buffered']
    #allocation3 [shape = 's32[1]{0}', space=sflag, size = 0x4, scoped, tag = 'scoped memory for tpu_custom_call.1']
    #allocation4 [shape = 's32[1]{0}', space=sflag, size = 0x4, scoped, tag = 'scoped memory for tpu_custom_call.1']
    #allocation5 [shape = 'u8[8192]{0}', space=vmem, size = 0x2000, scoped, tag = 'input window, operand 1, single buffered']
    #allocation6 [shape = 's32[1]{0}', space=sflag, size = 0x4, scoped, tag = 'scoped memory for tpu_custom_call.1']
    #allocation7 [shape = 'u8[65536]{0}', space=vmem, size = 0x10000, scoped, tag = 'input window, operand 2, single buffered']
    #allocation8 [shape = 'u8[262144]{0}', space=vmem, size = 0x40000, scoped, tag = 'input window, operand 3, single buffered']
    #allocation9 [shape = 's32[1]{0}', space=sflag, size = 0x4, scoped, tag = 'scoped memory for tpu_custom_call.1']
    #allocation10 [shape = 'u8[32768]{0}', space=vmem, size = 0x8000, scoped, tag = 'input window, operand 4, single buffered']
    #allocation11 [shape = 'u8[8192]{0}', space=vmem, size = 0x2000, scoped, tag = 'output window, operand 0, single buffered']
    %11 = vsyncpa [#allocation3], 0
    %12 = vsyncpa [#allocation6], 0
    %13 = vsyncpa [#allocation9], 0
    %14 = vsyncpa [#allocation4], 0
    // Predicated region
    $region2: #{tpu_custom_call.1} parent=1 // pred_check
      _
    $region3: #{tpu_custom_call.1} parent=1 // pred_check_branch
      %16 = sbr.rel (0) target = $region5
    $region4: #{tpu_custom_call.1} parent=1 // pred_region
      %s18 = ssub.s32 128, 128
      %19 = vsyncadd [#allocation3], %s18
      %s20 = sshll.u32 [#allocation2], 4
      %s21 = int_to_ptr.vmem [resolvable:$true] %s20
      %26 = dma.hbm_to_vmem [thread:$0]  %s0, 128, %s21, [#allocation3], 64, 64, 4
    $region5: #{tpu_custom_call.1} parent=1 // pred_fallthru
      _
    // Predicated region
    $region6: #{tpu_custom_call.1} parent=1 // pred_check
      _
    $region7: #{tpu_custom_call.1} parent=1 // pred_check_branch
      %28 = sbr.rel (0) target = $region9
    $region8: #{tpu_custom_call.1} parent=1 // pred_region
      %s30 = ssub.s32 256, 256
      %31 = vsyncadd [#allocation6], %s30
      %s32 = sshll.u32 [#allocation5], 4
      %s33 = int_to_ptr.vmem [resolvable:$true] %s32
      %38 = dma.hbm_to_vmem [thread:$0]  %s1, 256, %s33, [#allocation6], 128, 128, 8
    $region9: #{tpu_custom_call.1} parent=1 // pred_fallthru
      _
    // Predicated region
    $region10: #{tpu_custom_call.1} parent=1 // pred_check
      _
    $region11: #{tpu_custom_call.1} parent=1 // pred_check_branch
      %40 = sbr.rel (0) target = $region13
    $region12: #{tpu_custom_call.1} parent=1 // pred_region
      %s42 = ssub.s32 2048, 2048
      %43 = vsyncadd [#allocation6], %s42
      %s44 = sshll.u32 [#allocation7], 4
      %s45 = int_to_ptr.vmem [resolvable:$true] %s44
      %50 = dma.hbm_to_vmem [thread:$0]  %s2, 2048, %s45, [#allocation6], 128, 128, 8
    $region13: #{tpu_custom_call.1} parent=1 // pred_fallthru
      _
    // Predicated region
    $region14: #{tpu_custom_call.1} parent=1 // pred_check
      _
    $region15: #{tpu_custom_call.1} parent=1 // pred_check_branch
      %52 = sbr.rel (0) target = $region17
    $region16: #{tpu_custom_call.1} parent=1 // pred_region
      %s54 = ssub.s32 8192, 8192
      %55 = vsyncadd [#allocation9], %s54
      %s56 = sshll.u32 [#allocation8], 4
      %s57 = int_to_ptr.vmem [resolvable:$true] %s56
      %62 = dma.hbm_to_vmem [thread:$0]  %s3, 8192, %s57, [#allocation9], 64, 64, 4
    $region17: #{tpu_custom_call.1} parent=1 // pred_fallthru
      _
    // Predicated region
    $region18: #{tpu_custom_call.1} parent=1 // pred_check
      _
    $region19: #{tpu_custom_call.1} parent=1 // pred_check_branch
      %64 = sbr.rel (0) target = $region21
    $region20: #{tpu_custom_call.1} parent=1 // pred_region
      %s66 = ssub.s32 1024, 1024
      %67 = vsyncadd [#allocation9], %s66
      %s68 = sshll.u32 [#allocation10], 4
      %s69 = int_to_ptr.vmem [resolvable:$true] %s68
      %74 = dma.hbm_to_vmem [thread:$0]  %s4, 1024, %s69, [#allocation9], 64, 64, 4
    $region21: #{tpu_custom_call.1} parent=1 // pred_fallthru
      _
    // Predicated region
    $region22: #{tpu_custom_call.1} parent=1 // pred_check
      _
    $region23: #{tpu_custom_call.1} parent=1 // pred_check_branch
      %76 = sbr.rel (0) target = $region25
    $region24: #{tpu_custom_call.1} parent=1 // pred_region
      _
    $region25: #{tpu_custom_call.1} parent=1 // pred_fallthru
      _
    // Predicated region
    $region26: #{tpu_custom_call.1} parent=1 // pred_check
      _
    $region27: #{tpu_custom_call.1} parent=1 // pred_check_branch
      %78 = sbr.rel (0) target = $region29
    $region28: #{tpu_custom_call.1} parent=1 // pred_region
      %79 = dma.done [#allocation3], 128
    $region29: #{tpu_custom_call.1} parent=1 // pred_fallthru
      _
    // Predicated region
    $region30: #{tpu_custom_call.1} parent=1 // pred_check
      _
    $region31: #{tpu_custom_call.1} parent=1 // pred_check_branch
      %81 = sbr.rel (0) target = $region33
    $region32: #{tpu_custom_call.1} parent=1 // pred_region
      %82 = dma.done [#allocation6], 256
    $region33: #{tpu_custom_call.1} parent=1 // pred_fallthru
      _
    // Predicated region
    $region34: #{tpu_custom_call.1} parent=1 // pred_check
      _
    $region35: #{tpu_custom_call.1} parent=1 // pred_check_branch
      %84 = sbr.rel (0) target = $region37
    $region36: #{tpu_custom_call.1} parent=1 // pred_region
      %85 = dma.done [#allocation6], 2048
    $region37: #{tpu_custom_call.1} parent=1 // pred_fallthru
      _
    // Predicated region
    $region38: #{tpu_custom_call.1} parent=1 // pred_check
      _
    $region39: #{tpu_custom_call.1} parent=1 // pred_check_branch
      %87 = sbr.rel (0) target = $region41
    $region40: #{tpu_custom_call.1} parent=1 // pred_region
      %88 = dma.done [#allocation9], 8192
    $region41: #{tpu_custom_call.1} parent=1 // pred_fallthru
      _
    // Predicated region
    $region42: #{tpu_custom_call.1} parent=1 // pred_check
      _
    $region43: #{tpu_custom_call.1} parent=1 // pred_check_branch
      %90 = sbr.rel (0) target = $region45
    $region44: #{tpu_custom_call.1} parent=1 // pred_region
      %91 = dma.done [#allocation9], 1024
    $region45: #{tpu_custom_call.1} parent=1 // pred_fallthru
      _
    %v93 = vld [vmem:[#allocation5] sm:$0xff]
    %v94 = vld [vmem:[#allocation5 + $0x8] sm:$0xff]
    %v95 = vld [vmem:[#allocation7] sm:$0xff]
    %v96 = vld [vmem:[#allocation7 + $0x8] sm:$0xff]
    %v97 = vld [vmem:[#allocation7 + $0x10] sm:$0xff]
    %v98 = vld [vmem:[#allocation7 + $0x18] sm:$0xff]
    %v99 = vld [vmem:[#allocation7 + $0x20] sm:$0xff]
    %v100 = vld [vmem:[#allocation7 + $0x28] sm:$0xff]
    %v101 = vld [vmem:[#allocation7 + $0x30] sm:$0xff]
    %v102 = vld [vmem:[#allocation7 + $0x38] sm:$0xff]
    %v103 = vld [vmem:[#allocation7 + $0x40] sm:$0xff]
    %v104 = vld [vmem:[#allocation7 + $0x48] sm:$0xff]
    %v105 = vld [vmem:[#allocation7 + $0x50] sm:$0xff]
    %v106 = vld [vmem:[#allocation7 + $0x58] sm:$0xff]
    %v107 = vld [vmem:[#allocation7 + $0x60] sm:$0xff]
    %v108 = vld [vmem:[#allocation7 + $0x68] sm:$0xff]
    %v109 = vld [vmem:[#allocation7 + $0x70] sm:$0xff]
    %v110 = vld [vmem:[#allocation7 + $0x78] sm:$0xff]
    %v111 = vld [vmem:[%s5] sm:$0x1]
    %v112 = vlaneseq
    %v113 = vshrl.u32 %v112, 7
    %v114 = vsub.s32 0, %v113
    %v115 = vrot.slane %v111, %v114
    %116 = vmatprep.subr.mxu0 0.0
    %117 = vmatpush1.msra.mxu0 %v95
    %118 = vmatprep.subr.mxu0 0.0
    %119 = vmatpush1.msra.mxu0 %v96
    %120 = vmatprep.subr.mxu0 0.0
    %121 = vmatpush1.msra.mxu0 %v97
    %122 = vmatprep.subr.mxu0 0.0
    %123 = vmatpush1.msra.mxu0 %v98
    %124 = vmatprep.subr.mxu0 0.0
    %125 = vmatpush1.msra.mxu0 %v99
    %126 = vmatprep.subr.mxu0 0.0
    %127 = vmatpush1.msra.mxu0 %v100
    %128 = vmatprep.subr.mxu0 0.0
    %129 = vmatpush1.msra.mxu0 %v101
    %130 = vmatprep.subr.mxu0 0.0
    %131 = vmatpush1.msra.mxu0 %v102
    %132 = vmatprep.subr.mxu0 0.0
    %133 = vmatpush1.msra.mxu0 %v103
    %134 = vmatprep.subr.mxu0 0.0
    %135 = vmatpush1.msra.mxu0 %v104
    %136 = vmatprep.subr.mxu0 0.0
    %137 = vmatpush1.msra.mxu0 %v105
    %138 = vmatprep.subr.mxu0 0.0
    %139 = vmatpush1.msra.mxu0 %v106
    %140 = vmatprep.subr.mxu0 0.0
    %141 = vmatpush1.msra.mxu0 %v107
    %142 = vmatprep.subr.mxu0 0.0
    %143 = vmatpush1.msra.mxu0 %v108
    %144 = vmatprep.subr.mxu0 0.0
    %145 = vmatpush1.msra.mxu0 %v109
    %146 = vmatprep.subr.mxu0 0.0
    %147 = vmatpush1.msra.mxu0 %v110
    %148 = vmatprep.subr.mxu0 0.0
    %149 = vmatpush1.msra.mxu0 0.0
    %150 = vmatprep.subr.mxu0 0.0
    %151 = vmatpush1.msra.mxu0 0.0
    %152 = vmatprep.subr.mxu0 0.0
    %153 = vmatpush1.msra.mxu0 0.0
    %154 = vmatprep.subr.mxu0 0.0
    %155 = vmatpush1.msra.mxu0 0.0
    %156 = vmatprep.subr.mxu0 0.0
    %157 = vmatpush1.msra.mxu0 0.0
    %158 = vmatprep.subr.mxu0 0.0
    %159 = vmatpush1.msra.mxu0 0.0
    %160 = vmatprep.subr.mxu0 0.0
    %161 = vmatpush1.msra.mxu0 0.0
    %162 = vmatprep.subr.mxu0 0.0
    %163 = vmatpush1.msra.mxu0 0.0
    %164 = vmatprep.subr.mxu0 0.0
    %165 = vmatpush1.msra.mxu0 0.0
    %166 = vmatprep.subr.mxu0 0.0
    %167 = vmatpush1.msra.mxu0 0.0
    %168 = vmatprep.subr.mxu0 0.0
    %169 = vmatpush1.msra.mxu0 0.0
    %170 = vmatprep.subr.mxu0 0.0
    %171 = vmatpush1.msra.mxu0 0.0
    %172 = vmatprep.subr.mxu0 0.0
    %173 = vmatpush1.msra.mxu0 0.0
    %174 = vmatprep.subr.mxu0 0.0
    %175 = vmatpush1.msra.mxu0 0.0
    %176 = vmatprep.subr.mxu0 0.0
    %177 = vmatpush1.msra.mxu0 0.0
    %178 = vmatprep.subr.mxu0 0.0
    %179 = vmatpush1.msra.mxu0 0.0
    %180 = vmatprep.mubr.f32.mxu0 0.0
    %181 = vmatmul.mubr.f32.gmra.mrb[0].mxu0 %v93
    %v182 = vpop.f32.mrb[0].mxu0
    %v183 = vadd.f32 %v115, %v182
    %v184 = vpop.f32.mrb[0].mxu0
    %185 = vmatprep.mubr.f32.mxu0 0.0
    %186 = vmatmul.mubr.f32.gmra.mrb[0].mxu0 %v94
    %v187 = vpop.f32.mrb[0].mxu0
    %v188 = vadd.f32 %v115, %v187
    %v189 = vpop.f32.mrb[0].mxu0
    %190 = vdwg.mxu0
    %v191 = vtanh.pop %v183
    %v192 = vtanh.pop %v188
    %v193 = vld [vmem:[#allocation2] sm:$0xf]
    %v194 = vld [vmem:[#allocation2 + $0x4] sm:$0xf]
    %v195 = vld [vmem:[#allocation8] sm:$0xf]
    %v196 = vld [vmem:[#allocation8 + $0x4] sm:$0xf]
    %v197 = vld [vmem:[#allocation8 + $0x8] sm:$0xf]
    %v198 = vld [vmem:[#allocation8 + $0xc] sm:$0xf]
    %v199 = vld [vmem:[#allocation8 + $0x10] sm:$0xf]
    %v200 = vld [vmem:[#allocation8 + $0x14] sm:$0xf]
    %v201 = vld [vmem:[#allocation8 + $0x18] sm:$0xf]
    %v202 = vld [vmem:[#allocation8 + $0x1c] sm:$0xf]
    %v203 = vld [vmem:[#allocation8 + $0x20] sm:$0xf]
    %v204 = vld [vmem:[#allocation8 + $0x24] sm:$0xf]
    %v205 = vld [vmem:[#allocation8 + $0x28] sm:$0xf]
    %v206 = vld [vmem:[#allocation8 + $0x2c] sm:$0xf]
    %v207 = vld [vmem:[#allocation8 + $0x30] sm:$0xf]
    %v208 = vld [vmem:[#allocation8 + $0x34] sm:$0xf]
    %v209 = vld [vmem:[#allocation8 + $0x38] sm:$0xf]
    %v210 = vld [vmem:[#allocation8 + $0x3c] sm:$0xf]
    %v211 = vpack.c.bf16 %v192, %v191
    %v212 = vld [vmem:[#allocation8 + $0x40] sm:$0xf]
    %v213 = vld [vmem:[#allocation8 + $0x44] sm:$0xf]
    %v214 = vld [vmem:[#allocation8 + $0x48] sm:$0xf]
    %v215 = vld [vmem:[#allocation8 + $0x4c] sm:$0xf]
    %v216 = vld [vmem:[#allocation8 + $0x50] sm:$0xf]
    %v217 = vld [vmem:[#allocation8 + $0x54] sm:$0xf]
    %v218 = vld [vmem:[#allocation8 + $0x58] sm:$0xf]
    %v219 = vld [vmem:[#allocation8 + $0x5c] sm:$0xf]
    %v220 = vld [vmem:[#allocation8 + $0x60] sm:$0xf]
    %v221 = vld [vmem:[#allocation8 + $0x64] sm:$0xf]
    %v222 = vld [vmem:[#allocation8 + $0x68] sm:$0xf]
    %v223 = vld [vmem:[#allocation8 + $0x6c] sm:$0xf]
    %v224 = vld [vmem:[#allocation8 + $0x70] sm:$0xf]
    %v225 = vld [vmem:[#allocation8 + $0x74] sm:$0xf]
    %v226 = vld [vmem:[#allocation8 + $0x78] sm:$0xf]
    %v227 = vld [vmem:[#allocation8 + $0x7c] sm:$0xf]
    %v244 = vunpack.c.l.b16 %v212
    %v245 = vunpack.c.l.b16 %v213
    %v246 = vunpack.c.l.b16 %v214
    %v247 = vunpack.c.l.b16 %v215
    %v248 = vunpack.c.l.b16 %v216
    %v249 = vunpack.c.l.b16 %v217
    %v250 = vunpack.c.l.b16 %v218
    %v251 = vunpack.c.l.b16 %v219
    %v252 = vunpack.c.l.b16 %v220
    %v253 = vunpack.c.l.b16 %v221
    %v254 = vunpack.c.l.b16 %v222
    %v255 = vunpack.c.l.b16 %v223
    %v256 = vunpack.c.l.b16 %v224
    %v257 = vunpack.c.l.b16 %v225
    %v258 = vunpack.c.l.b16 %v226
    %v259 = vunpack.c.l.b16 %v227
    %v260 = vpack.c.b16 %v245, %v244
    %v261 = vpack.c.b16 %v247, %v246
    %v262 = vpack.c.b16 %v249, %v248
    %v263 = vpack.c.b16 %v251, %v250
    %v264 = vpack.c.b16 %v253, %v252
    %v265 = vpack.c.b16 %v255, %v254
    %v266 = vpack.c.b16 %v257, %v256
    %v267 = vpack.c.b16 %v259, %v258
    %276 = vmatprep.subr.bf16.mxu0 0
    %277 = vmatpush1.bf16.msra.mxu0 %v260
    %278 = vmatprep.subr.bf16.mxu0 0
    %279 = vmatpush1.bf16.msra.mxu0 %v261
    %280 = vmatprep.subr.bf16.mxu0 0
    %281 = vmatpush1.bf16.msra.mxu0 %v262
    %282 = vmatprep.subr.bf16.mxu0 0
    %283 = vmatpush1.bf16.msra.mxu0 %v263
    %284 = vmatprep.subr.bf16.mxu0 0
    %285 = vmatpush1.bf16.msra.mxu0 %v264
    %286 = vmatprep.subr.bf16.mxu0 0
    %287 = vmatpush1.bf16.msra.mxu0 %v265
    %288 = vmatprep.subr.bf16.mxu0 0
    %289 = vmatpush1.bf16.msra.mxu0 %v266
    %290 = vmatprep.subr.bf16.mxu0 0
    %291 = vmatpush1.bf16.msra.mxu0 %v267
    %292 = vmatprep.subr.bf16.mxu0 0
    %293 = vmatpush1.bf16.msra.mxu0 0
    %294 = vmatprep.subr.bf16.mxu0 0
    %295 = vmatpush1.bf16.msra.mxu0 0
    %296 = vmatprep.subr.bf16.mxu0 0
    %297 = vmatpush1.bf16.msra.mxu0 0
    %298 = vmatprep.subr.bf16.mxu0 0
    %299 = vmatpush1.bf16.msra.mxu0 0
    %300 = vmatprep.subr.bf16.mxu0 0
    %301 = vmatpush1.bf16.msra.mxu0 0
    %302 = vmatprep.subr.bf16.mxu0 0
    %303 = vmatpush1.bf16.msra.mxu0 0
    %304 = vmatprep.subr.bf16.mxu0 0
    %305 = vmatpush1.bf16.msra.mxu0 0
    %306 = vmatprep.subr.bf16.mxu0 0
    %307 = vmatpush1.bf16.msra.mxu0 0
    %308 = vmatprep.mubr.bf16.mxu0 0
    %309 = vmatmul.mubr.bf16.gmra.mrb[0].mxu0 %v211
    %v310 = vpop.f32.mrb[0].mxu0
    %v311 = vadd.f32 0.0, %v310
    %v312 = vpop.f32.mrb[0].mxu0
    %v313 = vpop.f32.mrb[0].mxu0
    %v314 = vadd.f32 0.0, %v313
    %v315 = vpop.f32.mrb[0].mxu0
    %316 = vdwg.mxu0
    %v319 = vunpack.c.l.b16 %v193
    %v320 = vunpack.c.l.b16 %v194
    %v321 = vpack.c.b16 %v320, %v319
    %v339 = vunpack.c.l.b16 %v195
    %v340 = vunpack.c.l.b16 %v196
    %v341 = vunpack.c.l.b16 %v197
    %v342 = vunpack.c.l.b16 %v198
    %v343 = vunpack.c.l.b16 %v199
    %v344 = vunpack.c.l.b16 %v200
    %v345 = vunpack.c.l.b16 %v201
    %v346 = vunpack.c.l.b16 %v202
    %v347 = vunpack.c.l.b16 %v203
    %v348 = vunpack.c.l.b16 %v204
    %v349 = vunpack.c.l.b16 %v205
    %v350 = vunpack.c.l.b16 %v206
    %v351 = vunpack.c.l.b16 %v207
    %v352 = vunpack.c.l.b16 %v208
    %v353 = vunpack.c.l.b16 %v209
    %v354 = vunpack.c.l.b16 %v210
    %v355 = vpack.c.b16 %v340, %v339
    %v356 = vpack.c.b16 %v342, %v341
    %v357 = vpack.c.b16 %v344, %v343
    %v358 = vpack.c.b16 %v346, %v345
    %v359 = vpack.c.b16 %v348, %v347
    %v360 = vpack.c.b16 %v350, %v349
    %v361 = vpack.c.b16 %v352, %v351
    %v362 = vpack.c.b16 %v354, %v353
    %371 = vmatprep.subr.bf16.mxu0 0
    %372 = vmatpush1.bf16.msra.mxu0 %v355
    %373 = vmatprep.subr.bf16.mxu0 0
    %374 = vmatpush1.bf16.msra.mxu0 %v356
    %375 = vmatprep.subr.bf16.mxu0 0
    %376 = vmatpush1.bf16.msra.mxu0 %v357
    %377 = vmatprep.subr.bf16.mxu0 0
    %378 = vmatpush1.bf16.msra.mxu0 %v358
    %379 = vmatprep.subr.bf16.mxu0 0
    %380 = vmatpush1.bf16.msra.mxu0 %v359
    %381 = vmatprep.subr.bf16.mxu0 0
    %382 = vmatpush1.bf16.msra.mxu0 %v360
    %383 = vmatprep.subr.bf16.mxu0 0
    %384 = vmatpush1.bf16.msra.mxu0 %v361
    %385 = vmatprep.subr.bf16.mxu0 0
    %386 = vmatpush1.bf16.msra.mxu0 %v362
    %387 = vmatprep.subr.bf16.mxu0 0
    %388 = vmatpush1.bf16.msra.mxu0 0
    %389 = vmatprep.subr.bf16.mxu0 0
    %390 = vmatpush1.bf16.msra.mxu0 0
    %391 = vmatprep.subr.bf16.mxu0 0
    %392 = vmatpush1.bf16.msra.mxu0 0
    %393 = vmatprep.subr.bf16.mxu0 0
    %394 = vmatpush1.bf16.msra.mxu0 0
    %395 = vmatprep.subr.bf16.mxu0 0
    %396 = vmatpush1.bf16.msra.mxu0 0
    %397 = vmatprep.subr.bf16.mxu0 0
    %398 = vmatpush1.bf16.msra.mxu0 0
    %399 = vmatprep.subr.bf16.mxu0 0
    %400 = vmatpush1.bf16.msra.mxu0 0
    %401 = vmatprep.subr.bf16.mxu0 0
    %402 = vmatpush1.bf16.msra.mxu0 0
    %403 = vmatprep.mubr.bf16.mxu0 0
    %404 = vmatmul.mubr.bf16.gmra.mrb[0].mxu0 %v321
    %v405 = vpop.f32.mrb[0].mxu0
    %v406 = vadd.f32 %v311, %v405
    %v407 = vpop.f32.mrb[0].mxu0
    %v408 = vpop.f32.mrb[0].mxu0
    %v409 = vadd.f32 %v314, %v408
    %v410 = vpop.f32.mrb[0].mxu0
    %411 = vdwg.mxu0
    %v412 = vld [vmem:[%s5 + $0x1] sm:$0x1]
    %v413 = vlaneseq
    %v414 = vshrl.u32 %v413, 7
    %v415 = vsub.s32 0, %v414
    %v416 = vrot.slane %v412, %v415
    %v417 = vadd.f32 %v406, %v416
    %v418 = vadd.f32 %v409, %v416
    %v419 = vpack.c.bf16 %v418, %v417
    %v420 = vmax.bf16 %v419, 0
    %v421 = vld [vmem:[#allocation8 + $0x80] sm:$0xf]
    %v422 = vld [vmem:[#allocation8 + $0x84] sm:$0xf]
    %v423 = vld [vmem:[#allocation8 + $0x88] sm:$0xf]
    %v424 = vld [vmem:[#allocation8 + $0x8c] sm:$0xf]
    %v425 = vld [vmem:[#allocation8 + $0x90] sm:$0xf]
    %v426 = vld [vmem:[#allocation8 + $0x94] sm:$0xf]
    %v427 = vld [vmem:[#allocation8 + $0x98] sm:$0xf]
    %v428 = vld [vmem:[#allocation8 + $0x9c] sm:$0xf]
    %v429 = vld [vmem:[#allocation8 + $0xa0] sm:$0xf]
    %v430 = vld [vmem:[#allocation8 + $0xa4] sm:$0xf]
    %v431 = vld [vmem:[#allocation8 + $0xa8] sm:$0xf]
    %v432 = vld [vmem:[#allocation8 + $0xac] sm:$0xf]
    %v433 = vld [vmem:[#allocation8 + $0xb0] sm:$0xf]
    %v434 = vld [vmem:[#allocation8 + $0xb4] sm:$0xf]
    %v435 = vld [vmem:[#allocation8 + $0xb8] sm:$0xf]
    %v436 = vld [vmem:[#allocation8 + $0xbc] sm:$0xf]
    %v437 = vld [vmem:[%s5 + $0x2] sm:$0x1]
    %v438 = vlaneseq
    %v439 = vshrl.u32 %v438, 7
    %v440 = vsub.s32 0, %v439
    %v441 = vrot.slane %v437, %v440
    %v458 = vunpack.c.l.b16 %v421
    %v459 = vunpack.c.l.b16 %v422
    %v460 = vunpack.c.l.b16 %v423
    %v461 = vunpack.c.l.b16 %v424
    %v462 = vunpack.c.l.b16 %v425
    %v463 = vunpack.c.l.b16 %v426
    %v464 = vunpack.c.l.b16 %v427
    %v465 = vunpack.c.l.b16 %v428
    %v466 = vunpack.c.l.b16 %v429
    %v467 = vunpack.c.l.b16 %v430
    %v468 = vunpack.c.l.b16 %v431
    %v469 = vunpack.c.l.b16 %v432
    %v470 = vunpack.c.l.b16 %v433
    %v471 = vunpack.c.l.b16 %v434
    %v472 = vunpack.c.l.b16 %v435
    %v473 = vunpack.c.l.b16 %v436
    %v474 = vpack.c.b16 %v459, %v458
    %v475 = vpack.c.b16 %v461, %v460
    %v476 = vpack.c.b16 %v463, %v462
    %v477 = vpack.c.b16 %v465, %v464
    %v478 = vpack.c.b16 %v467, %v466
    %v479 = vpack.c.b16 %v469, %v468
    %v480 = vpack.c.b16 %v471, %v470
    %v481 = vpack.c.b16 %v473, %v472
    %490 = vmatprep.subr.bf16.mxu0 0
    %491 = vmatpush1.bf16.msra.mxu0 %v474
    %492 = vmatprep.subr.bf16.mxu0 0
    %493 = vmatpush1.bf16.msra.mxu0 %v475
    %494 = vmatprep.subr.bf16.mxu0 0
    %495 = vmatpush1.bf16.msra.mxu0 %v476
    %496 = vmatprep.subr.bf16.mxu0 0
    %497 = vmatpush1.bf16.msra.mxu0 %v477
    %498 = vmatprep.subr.bf16.mxu0 0
    %499 = vmatpush1.bf16.msra.mxu0 %v478
    %500 = vmatprep.subr.bf16.mxu0 0
    %501 = vmatpush1.bf16.msra.mxu0 %v479
    %502 = vmatprep.subr.bf16.mxu0 0
    %503 = vmatpush1.bf16.msra.mxu0 %v480
    %504 = vmatprep.subr.bf16.mxu0 0
    %505 = vmatpush1.bf16.msra.mxu0 %v481
    %506 = vmatprep.subr.bf16.mxu0 0
    %507 = vmatpush1.bf16.msra.mxu0 0
    %508 = vmatprep.subr.bf16.mxu0 0
    %509 = vmatpush1.bf16.msra.mxu0 0
    %510 = vmatprep.subr.bf16.mxu0 0
    %511 = vmatpush1.bf16.msra.mxu0 0
    %512 = vmatprep.subr.bf16.mxu0 0
    %513 = vmatpush1.bf16.msra.mxu0 0
    %514 = vmatprep.subr.bf16.mxu0 0
    %515 = vmatpush1.bf16.msra.mxu0 0
    %516 = vmatprep.subr.bf16.mxu0 0
    %517 = vmatpush1.bf16.msra.mxu0 0
    %518 = vmatprep.subr.bf16.mxu0 0
    %519 = vmatpush1.bf16.msra.mxu0 0
    %520 = vmatprep.subr.bf16.mxu0 0
    %521 = vmatpush1.bf16.msra.mxu0 0
    %522 = vmatprep.mubr.bf16.mxu0 0
    %523 = vmatmul.mubr.bf16.gmra.mrb[0].mxu0 %v420
    %v524 = vpop.f32.mrb[0].mxu0
    %v525 = vadd.f32 %v441, %v524
    %v526 = vpop.f32.mrb[0].mxu0
    %v527 = vpop.f32.mrb[0].mxu0
    %v528 = vadd.f32 %v441, %v527
    %v529 = vpop.f32.mrb[0].mxu0
    %530 = vdwg.mxu0
    %v531 = vpack.c.bf16 %v528, %v525
    %v532 = vmax.bf16 %v531, 0
    %v533 = vld [vmem:[#allocation8 + $0xc0] sm:$0xf]
    %v534 = vld [vmem:[#allocation8 + $0xc4] sm:$0xf]
    %v535 = vld [vmem:[#allocation8 + $0xc8] sm:$0xf]
    %v536 = vld [vmem:[#allocation8 + $0xcc] sm:$0xf]
    %v537 = vld [vmem:[#allocation8 + $0xd0] sm:$0xf]
    %v538 = vld [vmem:[#allocation8 + $0xd4] sm:$0xf]
    %v539 = vld [vmem:[#allocation8 + $0xd8] sm:$0xf]
    %v540 = vld [vmem:[#allocation8 + $0xdc] sm:$0xf]
    %v541 = vld [vmem:[#allocation8 + $0xe0] sm:$0xf]
    %v542 = vld [vmem:[#allocation8 + $0xe4] sm:$0xf]
    %v543 = vld [vmem:[#allocation8 + $0xe8] sm:$0xf]
    %v544 = vld [vmem:[#allocation8 + $0xec] sm:$0xf]
    %v545 = vld [vmem:[#allocation8 + $0xf0] sm:$0xf]
    %v546 = vld [vmem:[#allocation8 + $0xf4] sm:$0xf]
    %v547 = vld [vmem:[#allocation8 + $0xf8] sm:$0xf]
    %v548 = vld [vmem:[#allocation8 + $0xfc] sm:$0xf]
    %v549 = vld [vmem:[%s5 + $0x3] sm:$0x1]
    %v550 = vlaneseq
    %v551 = vshrl.u32 %v550, 7
    %v552 = vsub.s32 0, %v551
    %v553 = vrot.slane %v549, %v552
    %v570 = vunpack.c.l.b16 %v533
    %v571 = vunpack.c.l.b16 %v534
    %v572 = vunpack.c.l.b16 %v535
    %v573 = vunpack.c.l.b16 %v536
    %v574 = vunpack.c.l.b16 %v537
    %v575 = vunpack.c.l.b16 %v538
    %v576 = vunpack.c.l.b16 %v539
    %v577 = vunpack.c.l.b16 %v540
    %v578 = vunpack.c.l.b16 %v541
    %v579 = vunpack.c.l.b16 %v542
    %v580 = vunpack.c.l.b16 %v543
    %v581 = vunpack.c.l.b16 %v544
    %v582 = vunpack.c.l.b16 %v545
    %v583 = vunpack.c.l.b16 %v546
    %v584 = vunpack.c.l.b16 %v547
    %v585 = vunpack.c.l.b16 %v548
    %v586 = vpack.c.b16 %v571, %v570
    %v587 = vpack.c.b16 %v573, %v572
    %v588 = vpack.c.b16 %v575, %v574
    %v589 = vpack.c.b16 %v577, %v576
    %v590 = vpack.c.b16 %v579, %v578
    %v591 = vpack.c.b16 %v581, %v580
    %v592 = vpack.c.b16 %v583, %v582
    %v593 = vpack.c.b16 %v585, %v584
    %602 = vmatprep.subr.bf16.mxu0 0
    %603 = vmatpush1.bf16.msra.mxu0 %v586
    %604 = vmatprep.subr.bf16.mxu0 0
    %605 = vmatpush1.bf16.msra.mxu0 %v587
    %606 = vmatprep.subr.bf16.mxu0 0
    %607 = vmatpush1.bf16.msra.mxu0 %v588
    %608 = vmatprep.subr.bf16.mxu0 0
    %609 = vmatpush1.bf16.msra.mxu0 %v589
    %610 = vmatprep.subr.bf16.mxu0 0
    %611 = vmatpush1.bf16.msra.mxu0 %v590
    %612 = vmatprep.subr.bf16.mxu0 0
    %613 = vmatpush1.bf16.msra.mxu0 %v591
    %614 = vmatprep.subr.bf16.mxu0 0
    %615 = vmatpush1.bf16.msra.mxu0 %v592
    %616 = vmatprep.subr.bf16.mxu0 0
    %617 = vmatpush1.bf16.msra.mxu0 %v593
    %618 = vmatprep.subr.bf16.mxu0 0
    %619 = vmatpush1.bf16.msra.mxu0 0
    %620 = vmatprep.subr.bf16.mxu0 0
    %621 = vmatpush1.bf16.msra.mxu0 0
    %622 = vmatprep.subr.bf16.mxu0 0
    %623 = vmatpush1.bf16.msra.mxu0 0
    %624 = vmatprep.subr.bf16.mxu0 0
    %625 = vmatpush1.bf16.msra.mxu0 0
    %626 = vmatprep.subr.bf16.mxu0 0
    %627 = vmatpush1.bf16.msra.mxu0 0
    %628 = vmatprep.subr.bf16.mxu0 0
    %629 = vmatpush1.bf16.msra.mxu0 0
    %630 = vmatprep.subr.bf16.mxu0 0
    %631 = vmatpush1.bf16.msra.mxu0 0
    %632 = vmatprep.subr.bf16.mxu0 0
    %633 = vmatpush1.bf16.msra.mxu0 0
    %634 = vmatprep.mubr.bf16.mxu0 0
    %635 = vmatmul.mubr.bf16.gmra.mrb[0].mxu0 %v532
    %v636 = vpop.f32.mrb[0].mxu0
    %v637 = vadd.f32 %v553, %v636
    %v638 = vpop.f32.mrb[0].mxu0
    %v639 = vpop.f32.mrb[0].mxu0
    %v640 = vadd.f32 %v553, %v639
    %v641 = vpop.f32.mrb[0].mxu0
    %642 = vdwg.mxu0
    %v643 = vpack.c.bf16 %v640, %v637
    %v644 = vmax.bf16 %v643, 0
    %v645 = vld [vmem:[#allocation8 + $0x100] sm:$0xf]
    %v646 = vld [vmem:[#allocation8 + $0x104] sm:$0xf]
    %v647 = vld [vmem:[#allocation8 + $0x108] sm:$0xf]
    %v648 = vld [vmem:[#allocation8 + $0x10c] sm:$0xf]
    %v649 = vld [vmem:[#allocation8 + $0x110] sm:$0xf]
    %v650 = vld [vmem:[#allocation8 + $0x114] sm:$0xf]
    %v651 = vld [vmem:[#allocation8 + $0x118] sm:$0xf]
    %v652 = vld [vmem:[#allocation8 + $0x11c] sm:$0xf]
    %v653 = vld [vmem:[#allocation8 + $0x120] sm:$0xf]
    %v654 = vld [vmem:[#allocation8 + $0x124] sm:$0xf]
    %v655 = vld [vmem:[#allocation8 + $0x128] sm:$0xf]
    %v656 = vld [vmem:[#allocation8 + $0x12c] sm:$0xf]
    %v657 = vld [vmem:[#allocation8 + $0x130] sm:$0xf]
    %v658 = vld [vmem:[#allocation8 + $0x134] sm:$0xf]
    %v659 = vld [vmem:[#allocation8 + $0x138] sm:$0xf]
    %v660 = vld [vmem:[#allocation8 + $0x13c] sm:$0xf]
    %v661 = vld [vmem:[%s5 + $0x4] sm:$0x1]
    %v662 = vlaneseq
    %v663 = vshrl.u32 %v662, 7
    %v664 = vsub.s32 0, %v663
    %v665 = vrot.slane %v661, %v664
    %v682 = vunpack.c.l.b16 %v645
    %v683 = vunpack.c.l.b16 %v646
    %v684 = vunpack.c.l.b16 %v647
    %v685 = vunpack.c.l.b16 %v648
    %v686 = vunpack.c.l.b16 %v649
    %v687 = vunpack.c.l.b16 %v650
    %v688 = vunpack.c.l.b16 %v651
    %v689 = vunpack.c.l.b16 %v652
    %v690 = vunpack.c.l.b16 %v653
    %v691 = vunpack.c.l.b16 %v654
    %v692 = vunpack.c.l.b16 %v655
    %v693 = vunpack.c.l.b16 %v656
    %v694 = vunpack.c.l.b16 %v657
    %v695 = vunpack.c.l.b16 %v658
    %v696 = vunpack.c.l.b16 %v659
    %v697 = vunpack.c.l.b16 %v660
    %v698 = vpack.c.b16 %v683, %v682
    %v699 = vpack.c.b16 %v685, %v684
    %v700 = vpack.c.b16 %v687, %v686
    %v701 = vpack.c.b16 %v689, %v688
    %v702 = vpack.c.b16 %v691, %v690
    %v703 = vpack.c.b16 %v693, %v692
    %v704 = vpack.c.b16 %v695, %v694
    %v705 = vpack.c.b16 %v697, %v696
    %714 = vmatprep.subr.bf16.mxu0 0
    %715 = vmatpush1.bf16.msra.mxu0 %v698
    %716 = vmatprep.subr.bf16.mxu0 0
    %717 = vmatpush1.bf16.msra.mxu0 %v699
    %718 = vmatprep.subr.bf16.mxu0 0
    %719 = vmatpush1.bf16.msra.mxu0 %v700
    %720 = vmatprep.subr.bf16.mxu0 0
    %721 = vmatpush1.bf16.msra.mxu0 %v701
    %722 = vmatprep.subr.bf16.mxu0 0
    %723 = vmatpush1.bf16.msra.mxu0 %v702
    %724 = vmatprep.subr.bf16.mxu0 0
    %725 = vmatpush1.bf16.msra.mxu0 %v703
    %726 = vmatprep.subr.bf16.mxu0 0
    %727 = vmatpush1.bf16.msra.mxu0 %v704
    %728 = vmatprep.subr.bf16.mxu0 0
    %729 = vmatpush1.bf16.msra.mxu0 %v705
    %730 = vmatprep.subr.bf16.mxu0 0
    %731 = vmatpush1.bf16.msra.mxu0 0
    %732 = vmatprep.subr.bf16.mxu0 0
    %733 = vmatpush1.bf16.msra.mxu0 0
    %734 = vmatprep.subr.bf16.mxu0 0
    %735 = vmatpush1.bf16.msra.mxu0 0
    %736 = vmatprep.subr.bf16.mxu0 0
    %737 = vmatpush1.bf16.msra.mxu0 0
    %738 = vmatprep.subr.bf16.mxu0 0
    %739 = vmatpush1.bf16.msra.mxu0 0
    %740 = vmatprep.subr.bf16.mxu0 0
    %741 = vmatpush1.bf16.msra.mxu0 0
    %742 = vmatprep.subr.bf16.mxu0 0
    %743 = vmatpush1.bf16.msra.mxu0 0
    %744 = vmatprep.subr.bf16.mxu0 0
    %745 = vmatpush1.bf16.msra.mxu0 0
    %746 = vmatprep.mubr.bf16.mxu0 0
    %747 = vmatmul.mubr.bf16.gmra.mrb[0].mxu0 %v644
    %v748 = vpop.f32.mrb[0].mxu0
    %v749 = vadd.f32 %v665, %v748
    %v750 = vpop.f32.mrb[0].mxu0
    %v751 = vpop.f32.mrb[0].mxu0
    %v752 = vadd.f32 %v665, %v751
    %v753 = vpop.f32.mrb[0].mxu0
    %754 = vdwg.mxu0
    %v755 = vpack.c.bf16 %v752, %v749
    %v756 = vmax.bf16 %v755, 0
    %v757 = vld [vmem:[#allocation8 + $0x140] sm:$0xf]
    %v758 = vld [vmem:[#allocation8 + $0x144] sm:$0xf]
    %v759 = vld [vmem:[#allocation8 + $0x148] sm:$0xf]
    %v760 = vld [vmem:[#allocation8 + $0x14c] sm:$0xf]
    %v761 = vld [vmem:[#allocation8 + $0x150] sm:$0xf]
    %v762 = vld [vmem:[#allocation8 + $0x154] sm:$0xf]
    %v763 = vld [vmem:[#allocation8 + $0x158] sm:$0xf]
    %v764 = vld [vmem:[#allocation8 + $0x15c] sm:$0xf]
    %v765 = vld [vmem:[#allocation8 + $0x160] sm:$0xf]
    %v766 = vld [vmem:[#allocation8 + $0x164] sm:$0xf]
    %v767 = vld [vmem:[#allocation8 + $0x168] sm:$0xf]
    %v768 = vld [vmem:[#allocation8 + $0x16c] sm:$0xf]
    %v769 = vld [vmem:[#allocation8 + $0x170] sm:$0xf]
    %v770 = vld [vmem:[#allocation8 + $0x174] sm:$0xf]
    %v771 = vld [vmem:[#allocation8 + $0x178] sm:$0xf]
    %v772 = vld [vmem:[#allocation8 + $0x17c] sm:$0xf]
    %v773 = vld [vmem:[%s5 + $0x5] sm:$0x1]
    %v774 = vlaneseq
    %v775 = vshrl.u32 %v774, 7
    %v776 = vsub.s32 0, %v775
    %v777 = vrot.slane %v773, %v776
    %v794 = vunpack.c.l.b16 %v757
    %v795 = vunpack.c.l.b16 %v758
    %v796 = vunpack.c.l.b16 %v759
    %v797 = vunpack.c.l.b16 %v760
    %v798 = vunpack.c.l.b16 %v761
    %v799 = vunpack.c.l.b16 %v762
    %v800 = vunpack.c.l.b16 %v763
    %v801 = vunpack.c.l.b16 %v764
    %v802 = vunpack.c.l.b16 %v765
    %v803 = vunpack.c.l.b16 %v766
    %v804 = vunpack.c.l.b16 %v767
    %v805 = vunpack.c.l.b16 %v768
    %v806 = vunpack.c.l.b16 %v769
    %v807 = vunpack.c.l.b16 %v770
    %v808 = vunpack.c.l.b16 %v771
    %v809 = vunpack.c.l.b16 %v772
    %v810 = vpack.c.b16 %v795, %v794
    %v811 = vpack.c.b16 %v797, %v796
    %v812 = vpack.c.b16 %v799, %v798
    %v813 = vpack.c.b16 %v801, %v800
    %v814 = vpack.c.b16 %v803, %v802
    %v815 = vpack.c.b16 %v805, %v804
    %v816 = vpack.c.b16 %v807, %v806
    %v817 = vpack.c.b16 %v809, %v808
    %826 = vmatprep.subr.bf16.mxu0 0
    %827 = vmatpush1.bf16.msra.mxu0 %v810
    %828 = vmatprep.subr.bf16.mxu0 0
    %829 = vmatpush1.bf16.msra.mxu0 %v811
    %830 = vmatprep.subr.bf16.mxu0 0
    %831 = vmatpush1.bf16.msra.mxu0 %v812
    %832 = vmatprep.subr.bf16.mxu0 0
    %833 = vmatpush1.bf16.msra.mxu0 %v813
    %834 = vmatprep.subr.bf16.mxu0 0
    %835 = vmatpush1.bf16.msra.mxu0 %v814
    %836 = vmatprep.subr.bf16.mxu0 0
    %837 = vmatpush1.bf16.msra.mxu0 %v815
    %838 = vmatprep.subr.bf16.mxu0 0
    %839 = vmatpush1.bf16.msra.mxu0 %v816
    %840 = vmatprep.subr.bf16.mxu0 0
    %841 = vmatpush1.bf16.msra.mxu0 %v817
    %842 = vmatprep.subr.bf16.mxu0 0
    %843 = vmatpush1.bf16.msra.mxu0 0
    %844 = vmatprep.subr.bf16.mxu0 0
    %845 = vmatpush1.bf16.msra.mxu0 0
    %846 = vmatprep.subr.bf16.mxu0 0
    %847 = vmatpush1.bf16.msra.mxu0 0
    %848 = vmatprep.subr.bf16.mxu0 0
    %849 = vmatpush1.bf16.msra.mxu0 0
    %850 = vmatprep.subr.bf16.mxu0 0
    %851 = vmatpush1.bf16.msra.mxu0 0
    %852 = vmatprep.subr.bf16.mxu0 0
    %853 = vmatpush1.bf16.msra.mxu0 0
    %854 = vmatprep.subr.bf16.mxu0 0
    %855 = vmatpush1.bf16.msra.mxu0 0
    %856 = vmatprep.subr.bf16.mxu0 0
    %857 = vmatpush1.bf16.msra.mxu0 0
    %858 = vmatprep.mubr.bf16.mxu0 0
    %859 = vmatmul.mubr.bf16.gmra.mrb[0].mxu0 %v756
    %v860 = vpop.f32.mrb[0].mxu0
    %v861 = vadd.f32 %v777, %v860
    %v862 = vpop.f32.mrb[0].mxu0
    %v863 = vpop.f32.mrb[0].mxu0
    %v864 = vadd.f32 %v777, %v863
    %v865 = vpop.f32.mrb[0].mxu0
    %866 = vdwg.mxu0
    %v867 = vpack.c.bf16 %v864, %v861
    %v868 = vmax.bf16 %v867, 0
    %v869 = vld [vmem:[#allocation8 + $0x180] sm:$0xf]
    %v870 = vld [vmem:[#allocation8 + $0x184] sm:$0xf]
    %v871 = vld [vmem:[#allocation8 + $0x188] sm:$0xf]
    %v872 = vld [vmem:[#allocation8 + $0x18c] sm:$0xf]
    %v873 = vld [vmem:[#allocation8 + $0x190] sm:$0xf]
    %v874 = vld [vmem:[#allocation8 + $0x194] sm:$0xf]
    %v875 = vld [vmem:[#allocation8 + $0x198] sm:$0xf]
    %v876 = vld [vmem:[#allocation8 + $0x19c] sm:$0xf]
    %v877 = vld [vmem:[#allocation8 + $0x1a0] sm:$0xf]
    %v878 = vld [vmem:[#allocation8 + $0x1a4] sm:$0xf]
    %v879 = vld [vmem:[#allocation8 + $0x1a8] sm:$0xf]
    %v880 = vld [vmem:[#allocation8 + $0x1ac] sm:$0xf]
    %v881 = vld [vmem:[#allocation8 + $0x1b0] sm:$0xf]
    %v882 = vld [vmem:[#allocation8 + $0x1b4] sm:$0xf]
    %v883 = vld [vmem:[#allocation8 + $0x1b8] sm:$0xf]
    %v884 = vld [vmem:[#allocation8 + $0x1bc] sm:$0xf]
    %v885 = vld [vmem:[%s5 + $0x6] sm:$0x1]
    %v886 = vlaneseq
    %v887 = vshrl.u32 %v886, 7
    %v888 = vsub.s32 0, %v887
    %v889 = vrot.slane %v885, %v888
    %v906 = vunpack.c.l.b16 %v869
    %v907 = vunpack.c.l.b16 %v870
    %v908 = vunpack.c.l.b16 %v871
    %v909 = vunpack.c.l.b16 %v872
    %v910 = vunpack.c.l.b16 %v873
    %v911 = vunpack.c.l.b16 %v874
    %v912 = vunpack.c.l.b16 %v875
    %v913 = vunpack.c.l.b16 %v876
    %v914 = vunpack.c.l.b16 %v877
    %v915 = vunpack.c.l.b16 %v878
    %v916 = vunpack.c.l.b16 %v879
    %v917 = vunpack.c.l.b16 %v880
    %v918 = vunpack.c.l.b16 %v881
    %v919 = vunpack.c.l.b16 %v882
    %v920 = vunpack.c.l.b16 %v883
    %v921 = vunpack.c.l.b16 %v884
    %v922 = vpack.c.b16 %v907, %v906
    %v923 = vpack.c.b16 %v909, %v908
    %v924 = vpack.c.b16 %v911, %v910
    %v925 = vpack.c.b16 %v913, %v912
    %v926 = vpack.c.b16 %v915, %v914
    %v927 = vpack.c.b16 %v917, %v916
    %v928 = vpack.c.b16 %v919, %v918
    %v929 = vpack.c.b16 %v921, %v920
    %938 = vmatprep.subr.bf16.mxu0 0
    %939 = vmatpush1.bf16.msra.mxu0 %v922
    %940 = vmatprep.subr.bf16.mxu0 0
    %941 = vmatpush1.bf16.msra.mxu0 %v923
    %942 = vmatprep.subr.bf16.mxu0 0
    %943 = vmatpush1.bf16.msra.mxu0 %v924
    %944 = vmatprep.subr.bf16.mxu0 0
    %945 = vmatpush1.bf16.msra.mxu0 %v925
    %946 = vmatprep.subr.bf16.mxu0 0
    %947 = vmatpush1.bf16.msra.mxu0 %v926
    %948 = vmatprep.subr.bf16.mxu0 0
    %949 = vmatpush1.bf16.msra.mxu0 %v927
    %950 = vmatprep.subr.bf16.mxu0 0
    %951 = vmatpush1.bf16.msra.mxu0 %v928
    %952 = vmatprep.subr.bf16.mxu0 0
    %953 = vmatpush1.bf16.msra.mxu0 %v929
    %954 = vmatprep.subr.bf16.mxu0 0
    %955 = vmatpush1.bf16.msra.mxu0 0
    %956 = vmatprep.subr.bf16.mxu0 0
    %957 = vmatpush1.bf16.msra.mxu0 0
    %958 = vmatprep.subr.bf16.mxu0 0
    %959 = vmatpush1.bf16.msra.mxu0 0
    %960 = vmatprep.subr.bf16.mxu0 0
    %961 = vmatpush1.bf16.msra.mxu0 0
    %962 = vmatprep.subr.bf16.mxu0 0
    %963 = vmatpush1.bf16.msra.mxu0 0
    %964 = vmatprep.subr.bf16.mxu0 0
    %965 = vmatpush1.bf16.msra.mxu0 0
    %966 = vmatprep.subr.bf16.mxu0 0
    %967 = vmatpush1.bf16.msra.mxu0 0
    %968 = vmatprep.subr.bf16.mxu0 0
    %969 = vmatpush1.bf16.msra.mxu0 0
    %970 = vmatprep.mubr.bf16.mxu0 0
    %971 = vmatmul.mubr.bf16.gmra.mrb[0].mxu0 %v868
    %v972 = vpop.f32.mrb[0].mxu0
    %v973 = vadd.f32 %v889, %v972
    %v974 = vpop.f32.mrb[0].mxu0
    %v975 = vpop.f32.mrb[0].mxu0
    %v976 = vadd.f32 %v889, %v975
    %v977 = vpop.f32.mrb[0].mxu0
    %978 = vdwg.mxu0
    %v979 = vpack.c.bf16 %v976, %v973
    %v980 = vmax.bf16 %v979, 0
    %v981 = vld [vmem:[#allocation8 + $0x1c0] sm:$0xf]
    %v982 = vld [vmem:[#allocation8 + $0x1c4] sm:$0xf]
    %v983 = vld [vmem:[#allocation8 + $0x1c8] sm:$0xf]
    %v984 = vld [vmem:[#allocation8 + $0x1cc] sm:$0xf]
    %v985 = vld [vmem:[#allocation8 + $0x1d0] sm:$0xf]
    %v986 = vld [vmem:[#allocation8 + $0x1d4] sm:$0xf]
    %v987 = vld [vmem:[#allocation8 + $0x1d8] sm:$0xf]
    %v988 = vld [vmem:[#allocation8 + $0x1dc] sm:$0xf]
    %v989 = vld [vmem:[#allocation8 + $0x1e0] sm:$0xf]
    %v990 = vld [vmem:[#allocation8 + $0x1e4] sm:$0xf]
    %v991 = vld [vmem:[#allocation8 + $0x1e8] sm:$0xf]
    %v992 = vld [vmem:[#allocation8 + $0x1ec] sm:$0xf]
    %v993 = vld [vmem:[#allocation8 + $0x1f0] sm:$0xf]
    %v994 = vld [vmem:[#allocation8 + $0x1f4] sm:$0xf]
    %v995 = vld [vmem:[#allocation8 + $0x1f8] sm:$0xf]
    %v996 = vld [vmem:[#allocation8 + $0x1fc] sm:$0xf]
    %v997 = vld [vmem:[%s5 + $0x7] sm:$0x1]
    %v998 = vlaneseq
    %v999 = vshrl.u32 %v998, 7
    %v1000 = vsub.s32 0, %v999
    %v1001 = vrot.slane %v997, %v1000
    %v1018 = vunpack.c.l.b16 %v981
    %v1019 = vunpack.c.l.b16 %v982
    %v1020 = vunpack.c.l.b16 %v983
    %v1021 = vunpack.c.l.b16 %v984
    %v1022 = vunpack.c.l.b16 %v985
    %v1023 = vunpack.c.l.b16 %v986
    %v1024 = vunpack.c.l.b16 %v987
    %v1025 = vunpack.c.l.b16 %v988
    %v1026 = vunpack.c.l.b16 %v989
    %v1027 = vunpack.c.l.b16 %v990
    %v1028 = vunpack.c.l.b16 %v991
    %v1029 = vunpack.c.l.b16 %v992
    %v1030 = vunpack.c.l.b16 %v993
    %v1031 = vunpack.c.l.b16 %v994
    %v1032 = vunpack.c.l.b16 %v995
    %v1033 = vunpack.c.l.b16 %v996
    %v1034 = vpack.c.b16 %v1019, %v1018
    %v1035 = vpack.c.b16 %v1021, %v1020
    %v1036 = vpack.c.b16 %v1023, %v1022
    %v1037 = vpack.c.b16 %v1025, %v1024
    %v1038 = vpack.c.b16 %v1027, %v1026
    %v1039 = vpack.c.b16 %v1029, %v1028
    %v1040 = vpack.c.b16 %v1031, %v1030
    %v1041 = vpack.c.b16 %v1033, %v1032
    %1050 = vmatprep.subr.bf16.mxu0 0
    %1051 = vmatpush1.bf16.msra.mxu0 %v1034
    %1052 = vmatprep.subr.bf16.mxu0 0
    %1053 = vmatpush1.bf16.msra.mxu0 %v1035
    %1054 = vmatprep.subr.bf16.mxu0 0
    %1055 = vmatpush1.bf16.msra.mxu0 %v1036
    %1056 = vmatprep.subr.bf16.mxu0 0
    %1057 = vmatpush1.bf16.msra.mxu0 %v1037
    %1058 = vmatprep.subr.bf16.mxu0 0
    %1059 = vmatpush1.bf16.msra.mxu0 %v1038
    %1060 = vmatprep.subr.bf16.mxu0 0
    %1061 = vmatpush1.bf16.msra.mxu0 %v1039
    %1062 = vmatprep.subr.bf16.mxu0 0
    %1063 = vmatpush1.bf16.msra.mxu0 %v1040
    %1064 = vmatprep.subr.bf16.mxu0 0
    %1065 = vmatpush1.bf16.msra.mxu0 %v1041
    %1066 = vmatprep.subr.bf16.mxu0 0
    %1067 = vmatpush1.bf16.msra.mxu0 0
    %1068 = vmatprep.subr.bf16.mxu0 0
    %1069 = vmatpush1.bf16.msra.mxu0 0
    %1070 = vmatprep.subr.bf16.mxu0 0
    %1071 = vmatpush1.bf16.msra.mxu0 0
    %1072 = vmatprep.subr.bf16.mxu0 0
    %1073 = vmatpush1.bf16.msra.mxu0 0
    %1074 = vmatprep.subr.bf16.mxu0 0
    %1075 = vmatpush1.bf16.msra.mxu0 0
    %1076 = vmatprep.subr.bf16.mxu0 0
    %1077 = vmatpush1.bf16.msra.mxu0 0
    %1078 = vmatprep.subr.bf16.mxu0 0
    %1079 = vmatpush1.bf16.msra.mxu0 0
    %1080 = vmatprep.subr.bf16.mxu0 0
    %1081 = vmatpush1.bf16.msra.mxu0 0
    %1082 = vmatprep.mubr.bf16.mxu0 0
    %1083 = vmatmul.mubr.bf16.gmra.mrb[0].mxu0 %v980
    %v1084 = vpop.f32.mrb[0].mxu0
    %v1085 = vadd.f32 %v1001, %v1084
    %v1086 = vpop.f32.mrb[0].mxu0
    %v1087 = vpop.f32.mrb[0].mxu0
    %v1088 = vadd.f32 %v1001, %v1087
    %v1089 = vpop.f32.mrb[0].mxu0
    %1090 = vdwg.mxu0
    %v1091 = vpack.c.bf16 %v1088, %v1085
    %v1092 = vmax.bf16 %v1091, 0
    %v1093 = vld [vmem:[#allocation10] sm:$0xf]
    %v1094 = vld [vmem:[#allocation10 + $0x4] sm:$0xf]
    %v1095 = vld [vmem:[#allocation10 + $0x8] sm:$0xf]
    %v1096 = vld [vmem:[#allocation10 + $0xc] sm:$0xf]
    %v1097 = vld [vmem:[#allocation10 + $0x10] sm:$0xf]
    %v1098 = vld [vmem:[#allocation10 + $0x14] sm:$0xf]
    %v1099 = vld [vmem:[#allocation10 + $0x18] sm:$0xf]
    %v1100 = vld [vmem:[#allocation10 + $0x1c] sm:$0xf]
    %v1101 = vld [vmem:[#allocation10 + $0x20] sm:$0xf]
    %v1102 = vld [vmem:[#allocation10 + $0x24] sm:$0xf]
    %v1103 = vld [vmem:[#allocation10 + $0x28] sm:$0xf]
    %v1104 = vld [vmem:[#allocation10 + $0x2c] sm:$0xf]
    %v1105 = vld [vmem:[#allocation10 + $0x30] sm:$0xf]
    %v1106 = vld [vmem:[#allocation10 + $0x34] sm:$0xf]
    %v1107 = vld [vmem:[#allocation10 + $0x38] sm:$0xf]
    %v1108 = vld [vmem:[#allocation10 + $0x3c] sm:$0xf]
    %v1109 = vld [vmem:[%s5 + $0x8] sm:$0x1]
    %v1110 = vlaneseq
    %v1111 = vshrl.u32 %v1110, 7
    %v1112 = vsub.s32 0, %v1111
    %v1113 = vrot.slane %v1109, %v1112
    %v1130 = vunpack.c.l.b16 %v1093
    %v1131 = vunpack.c.l.b16 %v1094
    %v1132 = vunpack.c.l.b16 %v1095
    %v1133 = vunpack.c.l.b16 %v1096
    %v1134 = vunpack.c.l.b16 %v1097
    %v1135 = vunpack.c.l.b16 %v1098
    %v1136 = vunpack.c.l.b16 %v1099
    %v1137 = vunpack.c.l.b16 %v1100
    %v1138 = vunpack.c.l.b16 %v1101
    %v1139 = vunpack.c.l.b16 %v1102
    %v1140 = vunpack.c.l.b16 %v1103
    %v1141 = vunpack.c.l.b16 %v1104
    %v1142 = vunpack.c.l.b16 %v1105
    %v1143 = vunpack.c.l.b16 %v1106
    %v1144 = vunpack.c.l.b16 %v1107
    %v1145 = vunpack.c.l.b16 %v1108
    %v1146 = vpack.c.b16 %v1131, %v1130
    %v1147 = vpack.c.b16 %v1133, %v1132
    %v1148 = vpack.c.b16 %v1135, %v1134
    %v1149 = vpack.c.b16 %v1137, %v1136
    %v1150 = vpack.c.b16 %v1139, %v1138
    %v1151 = vpack.c.b16 %v1141, %v1140
    %v1152 = vpack.c.b16 %v1143, %v1142
    %v1153 = vpack.c.b16 %v1145, %v1144
    %1162 = vmatprep.subr.bf16.mxu0 0
    %1163 = vmatpush1.bf16.msra.mxu0 %v1146
    %1164 = vmatprep.subr.bf16.mxu0 0
    %1165 = vmatpush1.bf16.msra.mxu0 %v1147
    %1166 = vmatprep.subr.bf16.mxu0 0
    %1167 = vmatpush1.bf16.msra.mxu0 %v1148
    %1168 = vmatprep.subr.bf16.mxu0 0
    %1169 = vmatpush1.bf16.msra.mxu0 %v1149
    %1170 = vmatprep.subr.bf16.mxu0 0
    %1171 = vmatpush1.bf16.msra.mxu0 %v1150
    %1172 = vmatprep.subr.bf16.mxu0 0
    %1173 = vmatpush1.bf16.msra.mxu0 %v1151
    %1174 = vmatprep.subr.bf16.mxu0 0
    %1175 = vmatpush1.bf16.msra.mxu0 %v1152
    %1176 = vmatprep.subr.bf16.mxu0 0
    %1177 = vmatpush1.bf16.msra.mxu0 %v1153
    %1178 = vmatprep.subr.bf16.mxu0 0
    %1179 = vmatpush1.bf16.msra.mxu0 0
    %1180 = vmatprep.subr.bf16.mxu0 0
    %1181 = vmatpush1.bf16.msra.mxu0 0
    %1182 = vmatprep.subr.bf16.mxu0 0
    %1183 = vmatpush1.bf16.msra.mxu0 0
    %1184 = vmatprep.subr.bf16.mxu0 0
    %1185 = vmatpush1.bf16.msra.mxu0 0
    %1186 = vmatprep.subr.bf16.mxu0 0
    %1187 = vmatpush1.bf16.msra.mxu0 0
    %1188 = vmatprep.subr.bf16.mxu0 0
    %1189 = vmatpush1.bf16.msra.mxu0 0
    %1190 = vmatprep.subr.bf16.mxu0 0
    %1191 = vmatpush1.bf16.msra.mxu0 0
    %1192 = vmatprep.subr.bf16.mxu0 0
    %1193 = vmatpush1.bf16.msra.mxu0 0
    %1194 = vmatprep.mubr.bf16.mxu0 0
    %1195 = vmatmul.mubr.bf16.gmra.mrb[0].mxu0 %v1092
    %v1196 = vpop.f32.mrb[0].mxu0
    %v1197 = vadd.f32 %v1113, %v1196
    %v1198 = vpop.f32.mrb[0].mxu0
    %v1199 = vpop.f32.mrb[0].mxu0
    %v1200 = vadd.f32 %v1113, %v1199
    %v1201 = vpop.f32.mrb[0].mxu0
    %1202 = vdwg.mxu0
    %v1203 = vxor.u32 %v1197, 2147483648
    %v1204 = vxor.u32 %v1200, 2147483648
    %v1205 = vmul.f32 %v1203, 1.442695
    %v1206 = vpow.pop %v1205
    %v1207 = vmul.f32 %v1204, 1.442695
    %v1208 = vpow.pop %v1207
    %v1209 = vadd.f32 %v1206, 1.0
    %v1210 = vadd.f32 %v1208, 1.0
    %v1211 = vrcp.pop %v1209
    %v1212 = vmul.f32 1.0, %v1211
    %v1213 = vrcp.pop %v1210
    %v1214 = vmul.f32 1.0, %v1213
    %1215 = vst [vmem:[#allocation11] sm:$0xff] %v1212
    %1216 = vst [vmem:[#allocation11 + $0x8] sm:$0xff] %v1214
    // Predicated region
    $region46: #{tpu_custom_call.1} parent=1 // pred_check
      _
    $region47: #{tpu_custom_call.1} parent=1 // pred_check_branch
      %1218 = sbr.rel (0) target = $region49
    $region48: #{tpu_custom_call.1} parent=1 // pred_region
      %s1220 = ssub.s32 256, 256
      %1221 = vsyncadd [#allocation4], %s1220
      %s1222 = sshll.u32 [#allocation11], 4
      %s1223 = int_to_ptr.vmem [resolvable:$true] %s1222
      %1228 = dma.vmem_to_hbm [thread:$0]  %s1223, 256, %s6, [#allocation4], 128, 128, 8
    $region49: #{tpu_custom_call.1} parent=1 // pred_fallthru
      _
    // Predicated region
    $region50: #{tpu_custom_call.1} parent=1 // pred_check
      _
    $region51: #{tpu_custom_call.1} parent=1 // pred_check_branch
      %1230 = sbr.rel (0) target = $region53
    $region52: #{tpu_custom_call.1} parent=1 // pred_region
      %1231 = dma.done [#allocation4], 256
    $region53: #{tpu_custom_call.1} parent=1 // pred_fallthru
      _
    %1232 = vsyncpa [#allocation3], 1
    %1233 = vsyncpa [#allocation6], 1
    %1234 = vsyncpa [#allocation9], 1
    %1235 = vsyncpa [#allocation4], 1

</llo_original>
